<compile_context>
chip_gen: v5e
topology: v5e:2x2
jax: 0.10.0
libtpu: 0.0.40
codegen_flags: <defaults>
</compile_context>

<pallas_src>
import functools

import jax
import jax.numpy as jnp
from jax.experimental import pallas as pl
from jax.experimental.pallas import tpu as pltpu


# bf16 operands for the MXU on all generations (v5e 4x128^2, v6e/v7x 2x256^2
# native bf16); accumulation stays f32 via preferred_element_type.
MATMUL_DTYPE = jnp.bfloat16


@functools.lru_cache(maxsize=None)
def _roll_sign() -> int:
    """Defensively resolve pltpu.roll's shift-sign convention vs np.roll."""
    def k(x_ref, o_ref):
        o_ref[...] = pltpu.roll(x_ref[...], 1, 1)

    x = jnp.arange(8 * 128, dtype=jnp.float32).reshape(8, 128)
    y = pl.pallas_call(
        k, out_shape=jax.ShapeDtypeStruct((8, 128), jnp.float32))(x)
    # np.roll semantics would give y[0, 1] == x[0, 0] == 0.
    return 1 if float(y[0, 1]) == 0.0 else -1


def _make_kernel(H, W, roll_sign):
    def kernel(x_ref, w1_ref, w2_ref, b_ref, o_ref):
        C, N = x_ref.shape                      # N = images_per_block * H * W
        x = x_ref[...]                          # (C, N) f32, spatial on lanes

        # (1, N) boolean boundary masks; selects broadcast along sublanes.
        lane = jax.lax.broadcasted_iota(jnp.int32, (1, N), 1)
        col = lane % W
        row = (lane // W) % H                   # per-image row (batch folded)
        row_first = row == 0
        row_last = row == H - 1
        col_first = col == 0
        col_last = col == W - 1

        def rot(a, s):
            # Circular roll along the flattened lane axis, np.roll semantics:
            # rot(a, s)[m] = a[(m - s) % N].  Cross-image / cross-row wraps
            # only occur at lanes where the boundary mask picks the other
            # (reflected) branch, so they never leak into the result.
            return pltpu.roll(a, (roll_sign * s) % N, 1)

        biases = b_ref[...]                     # (C, 2) f32

        def conv3x3(a, w_ref, b_col):
            # Deduplicated rolls: 2 row rolls + 2 column rolls per row = 8.
            a_below = rot(a, -W)                # value of row h+1
            a_above = rot(a, W)                 # value of row h-1
            rows = (
                jnp.where(row_first, a_below, a_above),   # dh = -1 (reflect)
                a,                                        # dh =  0
                jnp.where(row_last, a_above, a_below),    # dh = +1 (reflect)
            )
            # im2col: (9C, N) patch slab built directly in bf16, taps ordered
            # (kh, kw, cin) to match the (C, 9C) weight matrix layout.
            taps = []
            for r in rows:
                r_next = rot(r, -1)             # value of col w+1
                r_prev = rot(r, 1)              # value of col w-1
                taps.append(                                   # dw = -1
                    jnp.where(col_first, r_next, r_prev).astype(MATMUL_DTYPE))
                taps.append(r.astype(MATMUL_DTYPE))            # dw =  0
                taps.append(                                   # dw = +1
                    jnp.where(col_last, r_prev, r_next).astype(MATMUL_DTYPE))
            patches = jnp.concatenate(taps, axis=0)            # (9C, N) bf16
            # NOTE(v7x, large strips): split this into three K=3C matmuls
            # accumulated in f32 to shrink the live patch slab 3x if VMEM is
            # tight; at this size one K=288 matmul is best (v5e/v6e MRF path).
            y = jnp.dot(w_ref[...], patches,
                        preferred_element_type=jnp.float32)    # (C, N) f32
            return y + b_col                                   # (C,1) bcast

        y1 = jnp.maximum(conv3x3(x, w1_ref, biases[:, 0:1]), 0.0)  # conv1+ReLU
        y2 = conv3x3(y1, w2_ref, biases[:, 1:2])                   # conv2
        o_ref[...] = (x + y2).astype(o_ref.dtype)                  # residual

    return kernel


def resnet_block(x_nchw, w1_oihw, b1, w2_oihw, b2, *, images_per_block=None):
    """x: (B, C, H, W) f32. w*: (C, C, 3, 3) OIHW (PyTorch layout). b*: (C,)."""
    B, C, H, W = x_nchw.shape
    HW = H * W
    if images_per_block is None:
        # Fold the whole batch into the lane axis: one grid step (optimal on
        # single-TC v5e/v6e and for this toy size).  Use B // 2 on v7x to
        # shard the grid across its two TensorCores.
        images_per_block = B
    assert B % images_per_block == 0
    num_blocks = B // images_per_block
    n_lanes = images_per_block * HW

    # Layout plumbing only (tiny transposes, done once outside the kernel).
    xl = jnp.transpose(x_nchw, (1, 0, 2, 3)).reshape(C, B * HW)
    wm1 = jnp.transpose(w1_oihw, (0, 2, 3, 1)).reshape(C, 9 * C).astype(MATMUL_DTYPE)
    wm2 = jnp.transpose(w2_oihw, (0, 2, 3, 1)).reshape(C, 9 * C).astype(MATMUL_DTYPE)
    bc = jnp.stack([b1, b2], axis=1).astype(jnp.float32)          # (C, 2)

    # NOTE(production resolutions / v7x 64 MiB VMEM): replace the full-image
    # lane block with halo'd H-strips (strip_rows*W a multiple of 128, >= 512
    # lanes) sized so x/y1/out strips + the 9C bf16 patch slab + double
    # buffering fit the scoped VMEM limit; raise vmem_limit_bytes if needed.
    out = pl.pallas_call(
        _make_kernel(H, W, _roll_sign()),
        out_shape=jax.ShapeDtypeStruct((C, B * HW), x_nchw.dtype),
        grid_spec=pltpu.PrefetchScalarGridSpec(
            num_scalar_prefetch=0,
            grid=(num_blocks,),
            in_specs=[
                pl.BlockSpec((C, n_lanes), lambda i: (0, i)),
                pl.BlockSpec((C, 9 * C), lambda i: (0, 0)),
                pl.BlockSpec((C, 9 * C), lambda i: (0, 0)),
                pl.BlockSpec((C, 2), lambda i: (0, 0)),
            ],
            out_specs=pl.BlockSpec((C, n_lanes), lambda i: (0, i)),
        ),
        compiler_params=pltpu.CompilerParams(
            dimension_semantics=("parallel",)),
    )(xl, wm1, wm2, bc)

    return out.reshape(C, B, H, W).transpose(1, 0, 2, 3)


def ref_forward(x, w1, b1, w2, b2, matmul_dtype=jnp.float32):
    """Pure-JAX reference (lax.conv, NCHW/OIHW).

    With matmul_dtype=bf16 it mirrors the kernel's numerics (bf16 operands,
    f32 accumulation); with f32 it is the exact-precision reference.
    """
    precision = (jax.lax.Precision.HIGHEST
                 if matmul_dtype == jnp.float32 else None)

    def pad(a):
        return jnp.pad(a, ((0, 0), (0, 0), (1, 1), (1, 1)), mode="reflect")

    def conv(a, w, b):
        y = jax.lax.conv_general_dilated(
            pad(a).astype(matmul_dtype), w.astype(matmul_dtype), (1, 1),
            "VALID", dimension_numbers=("NCHW", "OIHW", "NCHW"),
            preferred_element_type=jnp.float32, precision=precision)
        return y + b.reshape(1, -1, 1, 1)

    y1 = jnp.maximum(conv(x, w1, b1), 0.0)
    y2 = conv(y1, w2, b2)
    return x + y2


if __name__ == "__main__":
    B, C, H, W = 2, 32, 16, 16      # dim = 32
    key = jax.random.PRNGKey(0)
    kx, kw1, kb1, kw2, kb2 = jax.random.split(key, 5)

    x = jax.random.normal(kx, (B, C, H, W), dtype=jnp.float32)
    # Deterministic synthetic nn.Conv2d(dim, dim, 3) parameters (OIHW layout),
    # scaled ~ fan-in init.  The spectral_norm reparameterization folds into
    # these effective weight values.
    scale = 1.0 / jnp.sqrt(9.0 * C)
    w1 = jax.random.normal(kw1, (C, C, 3, 3), dtype=jnp.float32) * scale
    b1 = jax.random.normal(kb1, (C,), dtype=jnp.float32) * 0.1
    w2 = jax.random.normal(kw2, (C, C, 3, 3), dtype=jnp.float32) * scale
    b2 = jax.random.normal(kb2, (C,), dtype=jnp.float32) * 0.1

    out = jax.block_until_ready(resnet_block(x, w1, b1, w2, b2))
    assert out.shape == (B, C, H, W)

    # Same-numerics reference (bf16 operands, f32 accumulation).
    ref_bf16 = jax.block_until_ready(
        ref_forward(x, w1, b1, w2, b2, matmul_dtype=MATMUL_DTYPE))
    err = float(jnp.max(jnp.abs(out - ref_bf16)))
    assert err < 2e-2, f"mismatch vs bf16-operand reference: {err}"

    # Loose sanity bound vs the exact f32 reference (bf16 rounding only).
    ref_f32 = jax.block_until_ready(ref_forward(x, w1, b1, w2, b2))
    err_f32 = float(jnp.max(jnp.abs(out - ref_f32)))
    assert err_f32 < 1e-1, f"mismatch vs f32 reference: {err_f32}"

    print("KERNEL_OK")
</pallas_src>

<mosaic_0001>
module attributes {stable_mosaic.version = 11 : i64} {
  func.func @k(%arg0: memref<8x128xf32, #tpu.memory_space<vmem>>, %arg1: memref<8x128xf32, #tpu.memory_space<vmem>>) attributes {dimension_semantics = [], scalar_prefetch = 0 : i64, scratch_operands = 0 : i64, tpu.core_type = #tpu.core_type<tc>} {
    %c0 = arith.constant 0 : index
    %c0_0 = arith.constant 0 : index
    %0 = vector.load %arg0[%c0, %c0_0] : memref<8x128xf32, #tpu.memory_space<vmem>>, vector<8x128xf32>
    %c1_i32 = arith.constant 1 : i32
    %1 = tpu.dynamic_rotate %0 by %c1_i32 dim 1 : vector<8x128xf32>, i32 -> vector<8x128xf32>
    %c0_1 = arith.constant 0 : index
    %c0_2 = arith.constant 0 : index
    %2 = vector.load %arg1[%c0_1, %c0_2] : memref<8x128xf32, #tpu.memory_space<vmem>>, vector<8x128xf32>
    tpu.vector_store %arg1[%c0_1, %c0_2], %1 {strides = array<i32>} : memref<8x128xf32, #tpu.memory_space<vmem>>, vector<8x128xf32>,
    return
  }
}

</mosaic_0001>

<llo_original>
// kernel: tpu_custom_call.1
$region0: #{tpu_custom_call.1}
  #allocation0 [shape = 'u32[]', space=smem, size = 0x4, offset = 0x4, fixed_abs, tag = 'smem constant byte address 0x4 - core index']
  #allocation1 [shape = 'u32[72,128]{1,0:T(1,128)}', space=vmem, size = 0x9000, scoped, tag = 'internal scratch']
  %s0 = inlined_call_operand.hbm [shape: f32[8,128], index: 0, kind: input, shape index: {}]
  %s1 = inlined_call_operand.hbm [shape: f32[8,128], index: 1, kind: output, shape index: {}]
  %s2 = sld [smem:[#allocation0]]
  $region18: #{tpu_custom_call.1} parent=0
    _
  %s4 = ssub.s32 1, %s2
  %s5 = scalar_select 0, %s4, %s2
  $region1: #{tpu_custom_call.1} parent=0
    #allocation2 [shape = 'u8[4096]{0}', space=vmem, size = 0x1000, scoped, tag = 'input window, operand 0, single buffered']
    #allocation3 [shape = 's32[1]{0}', space=sflag, size = 0x4, scoped, tag = 'scoped memory for tpu_custom_call.1']
    #allocation4 [shape = 's32[1]{0}', space=sflag, size = 0x4, scoped, tag = 'scoped memory for tpu_custom_call.1']
    #allocation5 [shape = 'u8[4096]{0}', space=vmem, size = 0x1000, scoped, tag = 'output window, operand 0, single buffered']
    %6 = vsyncpa [#allocation3], 0
    %7 = vsyncpa [#allocation4], 0
    // Predicated region
    $region2: #{tpu_custom_call.1} parent=1 // pred_check
      _
    $region3: #{tpu_custom_call.1} parent=1 // pred_check_branch
      %9 = sbr.rel (0) target = $region5
    $region4: #{tpu_custom_call.1} parent=1 // pred_region
      %11 = vsyncadd [#allocation3], 0
      %s13 = sshll.u32 %s0, 4
      %s14 = int_to_ptr.hbm [resolvable:$true] %s13
      %s15 = sshll.u32 [#allocation2], 4
      %s16 = int_to_ptr.vmem [resolvable:$true] %s15
      %18 = dma.hbm_to_vmem [thread:$0]  %s14, 128, %s16, [#allocation3]
    $region5: #{tpu_custom_call.1} parent=1 // pred_fallthru
      _
    // Predicated region
    $region6: #{tpu_custom_call.1} parent=1 // pred_check
      _
    $region7: #{tpu_custom_call.1} parent=1 // pred_check_branch
      %20 = sbr.rel (0) target = $region9
    $region8: #{tpu_custom_call.1} parent=1 // pred_region
      %22 = dma.done [#allocation3], 128
    $region9: #{tpu_custom_call.1} parent=1 // pred_fallthru
      _
    %v23 = vld [vmem:[#allocation2] sm:$0xff]
    %24 = vrot.lane.b32.xlu0 %v23, 1
    %v25 = vpop.permute.xlu0 %24
    %26 = vst [vmem:[#allocation5] sm:$0xff] %v25
    // Predicated region
    $region10: #{tpu_custom_call.1} parent=1 // pred_check
      _
    $region11: #{tpu_custom_call.1} parent=1 // pred_check_branch
      %28 = sbr.rel (0) target = $region13
    $region12: #{tpu_custom_call.1} parent=1 // pred_region
      %30 = vsyncadd [#allocation4], 0
      %s32 = sshll.u32 [#allocation5], 4
      %s33 = int_to_ptr.vmem [resolvable:$true] %s32
      %s34 = sshll.u32 %s1, 4
      %s35 = int_to_ptr.hbm [resolvable:$true] %s34
      %37 = dma.vmem_to_hbm [thread:$0]  %s33, 128, %s35, [#allocation4]
    $region13: #{tpu_custom_call.1} parent=1 // pred_fallthru
      _
    // Predicated region
    $region14: #{tpu_custom_call.1} parent=1 // pred_check
      _
    $region15: #{tpu_custom_call.1} parent=1 // pred_check_branch
      %39 = sbr.rel (0) target = $region17
    $region16: #{tpu_custom_call.1} parent=1 // pred_region
      %41 = dma.done [#allocation4], 128
    $region17: #{tpu_custom_call.1} parent=1 // pred_fallthru
      _
    %42 = vsyncpa [#allocation3], 1
    %43 = vsyncpa [#allocation4], 1

</llo_original>
